<compile_context>
chip_gen: v5e
topology: v5e:2x2
jax: 0.10.0
libtpu: 0.0.40
codegen_flags: <defaults>
</compile_context>

<pallas_src>
import functools

import jax
import jax.numpy as jnp
from jax.experimental import pallas as pl
from jax.experimental.pallas import tpu as pltpu

LAYER_DIMS = [(28 * 28, 256), (256, 128), (128, 64), (64, 32), (32, 16), (16, 10)]
DROPOUT_P = 0.5
DROPOUT_WIDTHS = (256, 128, 64, 32)   # dropout is applied after fc1..fc4
OUT_PAD = 128                         # lane-dense padded logits width


def _round_up(n, m):
    return (n + m - 1) // m * m


def _mlp_kernel(x_ref, *refs, training: bool):
    refs = list(refs)
    if training:
        u_refs = refs[:4]
        refs = refs[4:]
    else:
        u_refs = [None] * 4
    (w1, b1, w2, b2, w3, b3, w4, b4, w5, b5, w6, b6, out_ref) = refs

    def dense(h, w_ref, b_ref):
        # bf16 x bf16 -> f32 on the MXU; bias add in f32.
        return jnp.dot(h.astype(jnp.bfloat16), w_ref[...],
                       preferred_element_type=jnp.float32) + b_ref[...]

    def dropout(h, u_ref):
        if not training:
            return h
        # keep iff uniform >= p  -> P(keep) = 1 - p ; inverted scaling 1/(1-p).
        keep = u_ref[...] >= DROPOUT_P
        return jnp.where(keep, h * (1.0 / (1.0 - DROPOUT_P)), 0.0)

    h = x_ref[...]                                         # (TB, 784) bf16
    h = jnp.maximum(dropout(dense(h, w1, b1), u_refs[0]), 0.0)   # relu(drop(fc1))
    h = jnp.maximum(dropout(dense(h, w2, b2), u_refs[1]), 0.0)   # relu(drop(fc2))
    h = jnp.maximum(dropout(dense(h, w3, b3), u_refs[2]), 0.0)   # relu(drop(fc3))
    h = jnp.maximum(dropout(dense(h, w4, b4), u_refs[3]), 0.0)   # relu(drop(fc4))
    h = jnp.maximum(dense(h, w5, b5), 0.0)                       # relu(fc5)
    out_ref[...] = dense(h, w6, b6).astype(out_ref.dtype)        # fc6 (TB, 128)


def mlp_with_dropout(x_nchw, params, *, training: bool, dropout_uniforms=None):
    """x_nchw: (B, 1, 28, 28) f32.  params: list of (W[in,out] f32, b[out] f32).

    dropout_uniforms (training only): list of 4 f32 arrays in [0,1) with shapes
    (B, 256), (B, 128), (B, 64), (B, 32).
    """
    B = x_nchw.shape[0]
    x = x_nchw.reshape(B, 28 * 28).astype(jnp.bfloat16)   # == torch x.view(-1, 784)

    TB = min(512, _round_up(B, 8))
    B_pad = _round_up(B, TB)
    grid = (B_pad // TB,)
    if B_pad != B:
        x = jnp.pad(x, ((0, B_pad - B), (0, 0)))

    # Weights -> bf16 MXU operands, biases -> f32 row vectors.  Layer 6 is
    # zero-padded to 128 output columns for a lane-dense (unmasked) store.
    flat = []
    for li, (w, b) in enumerate(params):
        w = w.astype(jnp.bfloat16)
        b = b.reshape(1, -1).astype(jnp.float32)
        if li == len(params) - 1:
            w = jnp.pad(w, ((0, 0), (0, OUT_PAD - w.shape[1])))
            b = jnp.pad(b, ((0, 0), (0, OUT_PAD - b.shape[1])))
        flat += [w, b]

    inputs = [x]
    in_specs = [pl.BlockSpec((TB, 28 * 28), lambda i: (i, 0))]

    if training:
        assert dropout_uniforms is not None and len(dropout_uniforms) == 4
        for u, width in zip(dropout_uniforms, DROPOUT_WIDTHS):
            u = u.astype(jnp.float32)
            if u.shape[0] != B_pad:
                u = jnp.pad(u, ((0, B_pad - u.shape[0]), (0, 0)),
                            constant_values=1.0)  # padded rows: keep (sliced away)
            inputs.append(u)
            in_specs.append(pl.BlockSpec((TB, width), lambda i: (i, 0)))

    for arr in flat:                      # weights/biases pinned across the grid
        inputs.append(arr)
        in_specs.append(pl.BlockSpec(arr.shape, lambda i: (0, 0)))

    out = pl.pallas_call(
        functools.partial(_mlp_kernel, training=training),
        out_shape=jax.ShapeDtypeStruct((B_pad, OUT_PAD), jnp.float32),
        grid_spec=pltpu.PrefetchScalarGridSpec(
            num_scalar_prefetch=0,
            grid=grid,
            in_specs=in_specs,
            out_specs=pl.BlockSpec((TB, OUT_PAD), lambda i: (i, 0)),
        ),
        compiler_params=pltpu.CompilerParams(
            dimension_semantics=("parallel",),          # 2 TCs on v7x; free elsewhere
            vmem_limit_bytes=32 * 1024 * 1024,          # safe on v5e/v6e/v7x
        ),
    )(*inputs)
    return out[:B, :10]


def init_params(key):
    """Mimics PyTorch nn.Linear default init (U[-1/sqrt(fan_in), +])."""
    params = []
    for fan_in, fan_out in LAYER_DIMS:
        key, kw, kb = jax.random.split(key, 3)
        bound = 1.0 / jnp.sqrt(fan_in)
        w = jax.random.uniform(kw, (fan_in, fan_out), jnp.float32, -bound, bound)
        b = jax.random.uniform(kb, (fan_out,), jnp.float32, -bound, bound)
        params.append((w, b))
    return params


def _reference(x_nchw, params, *, training=False, dropout_uniforms=None):
    """Pure-JAX reference with the same bf16-operand / f32-accum semantics."""
    h = x_nchw.reshape(x_nchw.shape[0], 28 * 28).astype(jnp.float32)
    for i, (w, b) in enumerate(params):
        z = jnp.dot(h.astype(jnp.bfloat16), w.astype(jnp.bfloat16),
                    preferred_element_type=jnp.float32) + b
        if training and i < 4:
            keep = dropout_uniforms[i] >= DROPOUT_P
            z = jnp.where(keep, z * (1.0 / (1.0 - DROPOUT_P)), 0.0)
        if i < 5:
            z = jnp.maximum(z, 0.0)
        h = z
    return h


if __name__ == "__main__":
    key = jax.random.PRNGKey(0)
    key, kx, ku = jax.random.split(key, 3)
    params = init_params(key)
    x = jax.random.normal(kx, (8, 1, 28, 28), dtype=jnp.float32)

    # Eval mode (dropout = identity), checked against the pure-JAX reference.
    out_eval = jax.block_until_ready(mlp_with_dropout(x, params, training=False))
    ref_eval = _reference(x, params, training=False)
    assert out_eval.shape == (8, 10)
    assert jnp.allclose(out_eval, ref_eval, atol=2e-3, rtol=2e-3), \
        float(jnp.max(jnp.abs(out_eval - ref_eval)))

    # Train mode: deterministic host-generated uniforms -> exact reference check.
    u_keys = jax.random.split(ku, 4)
    uniforms = [jax.random.uniform(k, (x.shape[0], w), jnp.float32)
                for k, w in zip(u_keys, DROPOUT_WIDTHS)]
    out_train = jax.block_until_ready(
        mlp_with_dropout(x, params, training=True, dropout_uniforms=uniforms))
    ref_train = _reference(x, params, training=True, dropout_uniforms=uniforms)
    assert out_train.shape == (8, 10)
    assert jnp.allclose(out_train, ref_train, atol=2e-3, rtol=2e-3), \
        float(jnp.max(jnp.abs(out_train - ref_train)))

    print("KERNEL_OK")
</pallas_src>

<mosaic_0001>
module attributes {stable_mosaic.version = 11 : i64} {
  func.func @_mlp_kernel(%arg0: i32, %arg1: memref<8x784xbf16, #tpu.memory_space<vmem>>, %arg2: memref<784x256xbf16, #tpu.memory_space<vmem>>, %arg3: memref<1x256xf32, #tpu.memory_space<vmem>>, %arg4: memref<256x128xbf16, #tpu.memory_space<vmem>>, %arg5: memref<1x128xf32, #tpu.memory_space<vmem>>, %arg6: memref<128x64xbf16, #tpu.memory_space<vmem>>, %arg7: memref<1x64xf32, #tpu.memory_space<vmem>>, %arg8: memref<64x32xbf16, #tpu.memory_space<vmem>>, %arg9: memref<1x32xf32, #tpu.memory_space<vmem>>, %arg10: memref<32x16xbf16, #tpu.memory_space<vmem>>, %arg11: memref<1x16xf32, #tpu.memory_space<vmem>>, %arg12: memref<16x128xbf16, #tpu.memory_space<vmem>>, %arg13: memref<1x128xf32, #tpu.memory_space<vmem>>, %arg14: memref<8x128xf32, #tpu.memory_space<vmem>>) attributes {dimension_semantics = [#tpu.dimension_semantics<parallel>], iteration_bounds = array<i64: 1>, scalar_prefetch = 0 : i64, scratch_operands = 0 : i64, tpu.core_type = #tpu.core_type<tc>, window_params = [{transform_indices = @transform_0, window_bounds = array<i64: 8, 784>}, {pipeline_mode = #tpu.pipeline_mode<synchronous>, transform_indices = @transform_1, window_bounds = array<i64: 784, 256>}, {pipeline_mode = #tpu.pipeline_mode<synchronous>, transform_indices = @transform_2, window_bounds = array<i64: 1, 256>}, {pipeline_mode = #tpu.pipeline_mode<synchronous>, transform_indices = @transform_3, window_bounds = array<i64: 256, 128>}, {pipeline_mode = #tpu.pipeline_mode<synchronous>, transform_indices = @transform_4, window_bounds = array<i64: 1, 128>}, {pipeline_mode = #tpu.pipeline_mode<synchronous>, transform_indices = @transform_5, window_bounds = array<i64: 128, 64>}, {pipeline_mode = #tpu.pipeline_mode<synchronous>, transform_indices = @transform_6, window_bounds = array<i64: 1, 64>}, {pipeline_mode = #tpu.pipeline_mode<synchronous>, transform_indices = @transform_7, window_bounds = array<i64: 64, 32>}, {pipeline_mode = #tpu.pipeline_mode<synchronous>, transform_indices = @transform_8, window_bounds = array<i64: 1, 32>}, {pipeline_mode = #tpu.pipeline_mode<synchronous>, transform_indices = @transform_9, window_bounds = array<i64: 32, 16>}, {pipeline_mode = #tpu.pipeline_mode<synchronous>, transform_indices = @transform_10, window_bounds = array<i64: 1, 16>}, {pipeline_mode = #tpu.pipeline_mode<synchronous>, transform_indices = @transform_11, window_bounds = array<i64: 16, 128>}, {pipeline_mode = #tpu.pipeline_mode<synchronous>, transform_indices = @transform_12, window_bounds = array<i64: 1, 128>}, {transform_indices = @transform_13, window_bounds = array<i64: 8, 128>}]} {
    %c0 = arith.constant 0 : index
    %c0_0 = arith.constant 0 : index
    %0 = vector.load %arg1[%c0, %c0_0] : memref<8x784xbf16, #tpu.memory_space<vmem>>, vector<8x784xbf16>
    %c0_1 = arith.constant 0 : index
    %c0_2 = arith.constant 0 : index
    %1 = vector.load %arg2[%c0_1, %c0_2] : memref<784x256xbf16, #tpu.memory_space<vmem>>, vector<784x256xbf16>
    %cst = arith.constant dense<0.000000e+00> : vector<8x256xf32>
    %2 = tpu.matmul %0, %1, %cst {dimension_numbers = #tpu.dot_dimension_numbers<[1], [0], [0], [1], [0, 0, 1, 1], [], []>} : vector<8x784xbf16>, vector<784x256xbf16>, vector<8x256xf32> -> vector<8x256xf32>
    %c0_3 = arith.constant 0 : index
    %c0_4 = arith.constant 0 : index
    %3 = vector.load %arg3[%c0_3, %c0_4] : memref<1x256xf32, #tpu.memory_space<vmem>>, vector<1x256xf32>
    %4 = vector.broadcast %3 : vector<1x256xf32> to vector<8x256xf32>
    %5 = arith.addf %2, %4 : vector<8x256xf32>
    %cst_5 = arith.constant 0.000000e+00 : f32
    %6 = vector.broadcast %cst_5 : f32 to vector<8x256xf32>
    %7 = arith.maximumf %5, %6 : vector<8x256xf32>
    %8 = arith.truncf %7 : vector<8x256xf32> to vector<8x256xbf16>
    %c0_6 = arith.constant 0 : index
    %c0_7 = arith.constant 0 : index
    %9 = vector.load %arg4[%c0_6, %c0_7] : memref<256x128xbf16, #tpu.memory_space<vmem>>, vector<256x128xbf16>
    %cst_8 = arith.constant dense<0.000000e+00> : vector<8x128xf32>
    %10 = tpu.matmul %8, %9, %cst_8 {dimension_numbers = #tpu.dot_dimension_numbers<[1], [0], [0], [1], [0, 0, 1, 1], [], []>} : vector<8x256xbf16>, vector<256x128xbf16>, vector<8x128xf32> -> vector<8x128xf32>
    %c0_9 = arith.constant 0 : index
    %c0_10 = arith.constant 0 : index
    %11 = vector.load %arg5[%c0_9, %c0_10] : memref<1x128xf32, #tpu.memory_space<vmem>>, vector<1x128xf32>
    %12 = vector.broadcast %11 : vector<1x128xf32> to vector<8x128xf32>
    %13 = arith.addf %10, %12 : vector<8x128xf32>
    %cst_11 = arith.constant 0.000000e+00 : f32
    %14 = vector.broadcast %cst_11 : f32 to vector<8x128xf32>
    %15 = arith.maximumf %13, %14 : vector<8x128xf32>
    %16 = arith.truncf %15 : vector<8x128xf32> to vector<8x128xbf16>
    %c0_12 = arith.constant 0 : index
    %c0_13 = arith.constant 0 : index
    %17 = vector.load %arg6[%c0_12, %c0_13] : memref<128x64xbf16, #tpu.memory_space<vmem>>, vector<128x64xbf16>
    %cst_14 = arith.constant dense<0.000000e+00> : vector<8x64xf32>
    %18 = tpu.matmul %16, %17, %cst_14 {dimension_numbers = #tpu.dot_dimension_numbers<[1], [0], [0], [1], [0, 0, 1, 1], [], []>} : vector<8x128xbf16>, vector<128x64xbf16>, vector<8x64xf32> -> vector<8x64xf32>
    %c0_15 = arith.constant 0 : index
    %c0_16 = arith.constant 0 : index
    %19 = vector.load %arg7[%c0_15, %c0_16] : memref<1x64xf32, #tpu.memory_space<vmem>>, vector<1x64xf32>
    %20 = vector.broadcast %19 : vector<1x64xf32> to vector<8x64xf32>
    %21 = arith.addf %18, %20 : vector<8x64xf32>
    %cst_17 = arith.constant 0.000000e+00 : f32
    %22 = vector.broadcast %cst_17 : f32 to vector<8x64xf32>
    %23 = arith.maximumf %21, %22 : vector<8x64xf32>
    %24 = arith.truncf %23 : vector<8x64xf32> to vector<8x64xbf16>
    %c0_18 = arith.constant 0 : index
    %c0_19 = arith.constant 0 : index
    %25 = vector.load %arg8[%c0_18, %c0_19] : memref<64x32xbf16, #tpu.memory_space<vmem>>, vector<64x32xbf16>
    %cst_20 = arith.constant dense<0.000000e+00> : vector<8x32xf32>
    %26 = tpu.matmul %24, %25, %cst_20 {dimension_numbers = #tpu.dot_dimension_numbers<[1], [0], [0], [1], [0, 0, 1, 1], [], []>} : vector<8x64xbf16>, vector<64x32xbf16>, vector<8x32xf32> -> vector<8x32xf32>
    %c0_21 = arith.constant 0 : index
    %c0_22 = arith.constant 0 : index
    %27 = vector.load %arg9[%c0_21, %c0_22] : memref<1x32xf32, #tpu.memory_space<vmem>>, vector<1x32xf32>
    %28 = vector.broadcast %27 : vector<1x32xf32> to vector<8x32xf32>
    %29 = arith.addf %26, %28 : vector<8x32xf32>
    %cst_23 = arith.constant 0.000000e+00 : f32
    %30 = vector.broadcast %cst_23 : f32 to vector<8x32xf32>
    %31 = arith.maximumf %29, %30 : vector<8x32xf32>
    %32 = arith.truncf %31 : vector<8x32xf32> to vector<8x32xbf16>
    %c0_24 = arith.constant 0 : index
    %c0_25 = arith.constant 0 : index
    %33 = vector.load %arg10[%c0_24, %c0_25] : memref<32x16xbf16, #tpu.memory_space<vmem>>, vector<32x16xbf16>
    %cst_26 = arith.constant dense<0.000000e+00> : vector<8x16xf32>
    %34 = tpu.matmul %32, %33, %cst_26 {dimension_numbers = #tpu.dot_dimension_numbers<[1], [0], [0], [1], [0, 0, 1, 1], [], []>} : vector<8x32xbf16>, vector<32x16xbf16>, vector<8x16xf32> -> vector<8x16xf32>
    %c0_27 = arith.constant 0 : index
    %c0_28 = arith.constant 0 : index
    %35 = vector.load %arg11[%c0_27, %c0_28] : memref<1x16xf32, #tpu.memory_space<vmem>>, vector<1x16xf32>
    %36 = vector.broadcast %35 : vector<1x16xf32> to vector<8x16xf32>
    %37 = arith.addf %34, %36 : vector<8x16xf32>
    %cst_29 = arith.constant 0.000000e+00 : f32
    %38 = vector.broadcast %cst_29 : f32 to vector<8x16xf32>
    %39 = arith.maximumf %37, %38 : vector<8x16xf32>
    %40 = arith.truncf %39 : vector<8x16xf32> to vector<8x16xbf16>
    %c0_30 = arith.constant 0 : index
    %c0_31 = arith.constant 0 : index
    %41 = vector.load %arg12[%c0_30, %c0_31] : memref<16x128xbf16, #tpu.memory_space<vmem>>, vector<16x128xbf16>
    %cst_32 = arith.constant dense<0.000000e+00> : vector<8x128xf32>
    %42 = tpu.matmul %40, %41, %cst_32 {dimension_numbers = #tpu.dot_dimension_numbers<[1], [0], [0], [1], [0, 0, 1, 1], [], []>} : vector<8x16xbf16>, vector<16x128xbf16>, vector<8x128xf32> -> vector<8x128xf32>
    %c0_33 = arith.constant 0 : index
    %c0_34 = arith.constant 0 : index
    %43 = vector.load %arg13[%c0_33, %c0_34] : memref<1x128xf32, #tpu.memory_space<vmem>>, vector<1x128xf32>
    %44 = vector.broadcast %43 : vector<1x128xf32> to vector<8x128xf32>
    %45 = arith.addf %42, %44 : vector<8x128xf32>
    %c0_35 = arith.constant 0 : index
    %c0_36 = arith.constant 0 : index
    %46 = vector.load %arg14[%c0_35, %c0_36] : memref<8x128xf32, #tpu.memory_space<vmem>>, vector<8x128xf32>
    tpu.vector_store %arg14[%c0_35, %c0_36], %45 {strides = array<i32>} : memref<8x128xf32, #tpu.memory_space<vmem>>, vector<8x128xf32>,
    return
  }
  func.func @transform_0(%arg0: i32) -> (i32, i32) {
    %c0_i32 = arith.constant 0 : i32
    %c0_i32_0 = arith.constant 0 : i32
    return %arg0, %c0_i32 : i32, i32
  }
  func.func @transform_1(%arg0: i32) -> (i32, i32) {
    %c0_i32 = arith.constant 0 : i32
    %c0_i32_0 = arith.constant 0 : i32
    %c0_i32_1 = arith.constant 0 : i32
    return %c0_i32, %c0_i32_0 : i32, i32
  }
  func.func @transform_2(%arg0: i32) -> (i32, i32) {
    %c0_i32 = arith.constant 0 : i32
    %c0_i32_0 = arith.constant 0 : i32
    %c0_i32_1 = arith.constant 0 : i32
    return %c0_i32, %c0_i32_0 : i32, i32
  }
  func.func @transform_3(%arg0: i32) -> (i32, i32) {
    %c0_i32 = arith.constant 0 : i32
    %c0_i32_0 = arith.constant 0 : i32
    %c0_i32_1 = arith.constant 0 : i32
    return %c0_i32, %c0_i32_0 : i32, i32
  }
  func.func @transform_4(%arg0: i32) -> (i32, i32) {
    %c0_i32 = arith.constant 0 : i32
    %c0_i32_0 = arith.constant 0 : i32
    %c0_i32_1 = arith.constant 0 : i32
    return %c0_i32, %c0_i32_0 : i32, i32
  }
  func.func @transform_5(%arg0: i32) -> (i32, i32) {
    %c0_i32 = arith.constant 0 : i32
    %c0_i32_0 = arith.constant 0 : i32
    %c0_i32_1 = arith.constant 0 : i32
    return %c0_i32, %c0_i32_0 : i32, i32
  }
  func.func @transform_6(%arg0: i32) -> (i32, i32) {
    %c0_i32 = arith.constant 0 : i32
    %c0_i32_0 = arith.constant 0 : i32
    %c0_i32_1 = arith.constant 0 : i32
    return %c0_i32, %c0_i32_0 : i32, i32
  }
  func.func @transform_7(%arg0: i32) -> (i32, i32) {
    %c0_i32 = arith.constant 0 : i32
    %c0_i32_0 = arith.constant 0 : i32
    %c0_i32_1 = arith.constant 0 : i32
    return %c0_i32, %c0_i32_0 : i32, i32
  }
  func.func @transform_8(%arg0: i32) -> (i32, i32) {
    %c0_i32 = arith.constant 0 : i32
    %c0_i32_0 = arith.constant 0 : i32
    %c0_i32_1 = arith.constant 0 : i32
    return %c0_i32, %c0_i32_0 : i32, i32
  }
  func.func @transform_9(%arg0: i32) -> (i32, i32) {
    %c0_i32 = arith.constant 0 : i32
    %c0_i32_0 = arith.constant 0 : i32
    %c0_i32_1 = arith.constant 0 : i32
    return %c0_i32, %c0_i32_0 : i32, i32
  }
  func.func @transform_10(%arg0: i32) -> (i32, i32) {
    %c0_i32 = arith.constant 0 : i32
    %c0_i32_0 = arith.constant 0 : i32
    %c0_i32_1 = arith.constant 0 : i32
    return %c0_i32, %c0_i32_0 : i32, i32
  }
  func.func @transform_11(%arg0: i32) -> (i32, i32) {
    %c0_i32 = arith.constant 0 : i32
    %c0_i32_0 = arith.constant 0 : i32
    %c0_i32_1 = arith.constant 0 : i32
    return %c0_i32, %c0_i32_0 : i32, i32
  }
  func.func @transform_12(%arg0: i32) -> (i32, i32) {
    %c0_i32 = arith.constant 0 : i32
    %c0_i32_0 = arith.constant 0 : i32
    %c0_i32_1 = arith.constant 0 : i32
    return %c0_i32, %c0_i32_0 : i32, i32
  }
  func.func @transform_13(%arg0: i32) -> (i32, i32) {
    %c0_i32 = arith.constant 0 : i32
    %c0_i32_0 = arith.constant 0 : i32
    return %arg0, %c0_i32 : i32, i32
  }
}

</mosaic_0001>

<llo_original>
// kernel: tpu_custom_call.1
$region0: #{tpu_custom_call.1}
  #allocation0 [shape = 'u32[]', space=smem, size = 0x4, offset = 0x4, fixed_abs, tag = 'smem constant byte address 0x4 - core index']
  #allocation1 [shape = 'u32[72,128]{1,0:T(1,128)}', space=vmem, size = 0x9000, scoped, tag = 'internal scratch']
  %s0 = inlined_call_operand.vmem [shape: bf16[8,784], index: 0, kind: input, shape index: {}]
  %s1 = inlined_call_operand.hbm [shape: bf16[784,256], index: 1, kind: input, shape index: {}]
  %s2 = inlined_call_operand.vmem [shape: f32[1,256], index: 2, kind: input, shape index: {}]
  %s3 = inlined_call_operand.hbm [shape: bf16[256,128], index: 3, kind: input, shape index: {}]
  %s4 = inlined_call_operand.vmem [shape: f32[1,128], index: 4, kind: input, shape index: {}]
  %s5 = inlined_call_operand.vmem [shape: bf16[128,64], index: 5, kind: input, shape index: {}]
  %s6 = inlined_call_operand.vmem [shape: f32[1,64], index: 6, kind: input, shape index: {}]
  %s7 = inlined_call_operand.vmem [shape: bf16[64,32], index: 7, kind: input, shape index: {}]
  %s8 = inlined_call_operand.vmem [shape: f32[1,32], index: 8, kind: input, shape index: {}]
  %s9 = inlined_call_operand.vmem [shape: bf16[32,16], index: 9, kind: input, shape index: {}]
  %s10 = inlined_call_operand.vmem [shape: f32[1,16], index: 10, kind: input, shape index: {}]
  %s11 = inlined_call_operand.vmem [shape: bf16[16,128], index: 11, kind: input, shape index: {}]
  %s12 = inlined_call_operand.vmem [shape: f32[1,128], index: 12, kind: input, shape index: {}]
  %s13 = inlined_call_operand.hbm [shape: f32[8,128], index: 13, kind: output, shape index: {}]
  %s14 = sld [smem:[#allocation0]]
  $region70: #{tpu_custom_call.1} parent=0
    _
  %s16 = ssub.s32 1, %s14
  %s17 = scalar_select 0, %s16, %s14
  $region1: #{tpu_custom_call.1} parent=0
    #allocation2 [shape = 'u8[401408]{0}', space=vmem, size = 0x62000, scoped, tag = 'input window, operand 1, single buffered']
    #allocation3 [shape = 's32[1]{0}', space=sflag, size = 0x4, scoped, tag = 'scoped memory for tpu_custom_call.1']
    #allocation4 [shape = 's32[1]{0}', space=sflag, size = 0x4, scoped, tag = 'scoped memory for tpu_custom_call.1']
    #allocation5 [shape = 'u8[65536]{0}', space=vmem, size = 0x10000, scoped, tag = 'input window, operand 3, single buffered']
    #allocation6 [shape = 's32[1]{0}', space=sflag, size = 0x4, scoped, tag = 'scoped memory for tpu_custom_call.1']
    #allocation7 [shape = 'u8[4096]{0}', space=vmem, size = 0x1000, scoped, tag = 'output window, operand 0, single buffered']
    %18 = vsyncpa [#allocation3], 0
    %19 = vsyncpa [#allocation6], 0
    %20 = vsyncpa [#allocation4], 0
    // Predicated region
    $region2: #{tpu_custom_call.1} parent=1 // pred_check
      _
    $region3: #{tpu_custom_call.1} parent=1 // pred_check_branch
      %22 = sbr.rel (0) target = $region5
    $region4: #{tpu_custom_call.1} parent=1 // pred_region
      _
    $region5: #{tpu_custom_call.1} parent=1 // pred_fallthru
      _
    // Predicated region
    $region6: #{tpu_custom_call.1} parent=1 // pred_check
      _
    $region7: #{tpu_custom_call.1} parent=1 // pred_check_branch
      %24 = sbr.rel (0) target = $region9
    $region8: #{tpu_custom_call.1} parent=1 // pred_region
      %26 = vsyncadd [#allocation3], 0
      %s27 = sshll.u32 %s1, 4
      %s28 = int_to_ptr.hbm [resolvable:$true] %s27
      %s29 = sshll.u32 [#allocation2], 4
      %s30 = int_to_ptr.vmem [resolvable:$true] %s29
      %35 = dma.hbm_to_vmem [thread:$0]  %s28, 12544, %s30, [#allocation3], 128, 128, 8
    $region9: #{tpu_custom_call.1} parent=1 // pred_fallthru
      _
    // Predicated region
    $region10: #{tpu_custom_call.1} parent=1 // pred_check
      _
    $region11: #{tpu_custom_call.1} parent=1 // pred_check_branch
      %37 = sbr.rel (0) target = $region13
    $region12: #{tpu_custom_call.1} parent=1 // pred_region
      _
    $region13: #{tpu_custom_call.1} parent=1 // pred_fallthru
      _
    // Predicated region
    $region14: #{tpu_custom_call.1} parent=1 // pred_check
      _
    $region15: #{tpu_custom_call.1} parent=1 // pred_check_branch
      %39 = sbr.rel (0) target = $region17
    $region16: #{tpu_custom_call.1} parent=1 // pred_region
      %41 = vsyncadd [#allocation6], 0
      %s42 = sshll.u32 %s3, 4
      %s43 = int_to_ptr.hbm [resolvable:$true] %s42
      %s44 = sshll.u32 [#allocation5], 4
      %s45 = int_to_ptr.vmem [resolvable:$true] %s44
      %50 = dma.hbm_to_vmem [thread:$0]  %s43, 2048, %s45, [#allocation6], 64, 64, 4
    $region17: #{tpu_custom_call.1} parent=1 // pred_fallthru
      _
    // Predicated region
    $region18: #{tpu_custom_call.1} parent=1 // pred_check
      _
    $region19: #{tpu_custom_call.1} parent=1 // pred_check_branch
      %52 = sbr.rel (0) target = $region21
    $region20: #{tpu_custom_call.1} parent=1 // pred_region
      _
    $region21: #{tpu_custom_call.1} parent=1 // pred_fallthru
      _
    // Predicated region
    $region22: #{tpu_custom_call.1} parent=1 // pred_check
      _
    $region23: #{tpu_custom_call.1} parent=1 // pred_check_branch
      %54 = sbr.rel (0) target = $region25
    $region24: #{tpu_custom_call.1} parent=1 // pred_region
      _
    $region25: #{tpu_custom_call.1} parent=1 // pred_fallthru
      _
    // Predicated region
    $region26: #{tpu_custom_call.1} parent=1 // pred_check
      _
    $region27: #{tpu_custom_call.1} parent=1 // pred_check_branch
      %56 = sbr.rel (0) target = $region29
    $region28: #{tpu_custom_call.1} parent=1 // pred_region
      _
    $region29: #{tpu_custom_call.1} parent=1 // pred_fallthru
      _
    // Predicated region
    $region30: #{tpu_custom_call.1} parent=1 // pred_check
      _
    $region31: #{tpu_custom_call.1} parent=1 // pred_check_branch
      %58 = sbr.rel (0) target = $region33
    $region32: #{tpu_custom_call.1} parent=1 // pred_region
      _
    $region33: #{tpu_custom_call.1} parent=1 // pred_fallthru
      _
    // Predicated region
    $region34: #{tpu_custom_call.1} parent=1 // pred_check
      _
    $region35: #{tpu_custom_call.1} parent=1 // pred_check_branch
      %60 = sbr.rel (0) target = $region37
    $region36: #{tpu_custom_call.1} parent=1 // pred_region
      _
    $region37: #{tpu_custom_call.1} parent=1 // pred_fallthru
      _
    // Predicated region
    $region38: #{tpu_custom_call.1} parent=1 // pred_check
      _
    $region39: #{tpu_custom_call.1} parent=1 // pred_check_branch
      %62 = sbr.rel (0) target = $region41
    $region40: #{tpu_custom_call.1} parent=1 // pred_region
      _
    $region41: #{tpu_custom_call.1} parent=1 // pred_fallthru
      _
    // Predicated region
    $region42: #{tpu_custom_call.1} parent=1 // pred_check
      _
    $region43: #{tpu_custom_call.1} parent=1 // pred_check_branch
      %64 = sbr.rel (0) target = $region45
    $region44: #{tpu_custom_call.1} parent=1 // pred_region
      _
    $region45: #{tpu_custom_call.1} parent=1 // pred_fallthru
      _
    // Predicated region
    $region46: #{tpu_custom_call.1} parent=1 // pred_check
      _
    $region47: #{tpu_custom_call.1} parent=1 // pred_check_branch
      %66 = sbr.rel (0) target = $region49
    $region48: #{tpu_custom_call.1} parent=1 // pred_region
      _
    $region49: #{tpu_custom_call.1} parent=1 // pred_fallthru
      _
    // Predicated region
    $region50: #{tpu_custom_call.1} parent=1 // pred_check
      _
    $region51: #{tpu_custom_call.1} parent=1 // pred_check_branch
      %68 = sbr.rel (0) target = $region53
    $region52: #{tpu_custom_call.1} parent=1 // pred_region
      _
    $region53: #{tpu_custom_call.1} parent=1 // pred_fallthru
      _
    // Predicated region
    $region54: #{tpu_custom_call.1} parent=1 // pred_check
      _
    $region55: #{tpu_custom_call.1} parent=1 // pred_check_branch
      %70 = sbr.rel (0) target = $region57
    $region56: #{tpu_custom_call.1} parent=1 // pred_region
      %72 = dma.done [#allocation3], 12544
    $region57: #{tpu_custom_call.1} parent=1 // pred_fallthru
      _
    // Predicated region
    $region58: #{tpu_custom_call.1} parent=1 // pred_check
      _
    $region59: #{tpu_custom_call.1} parent=1 // pred_check_branch
      %74 = sbr.rel (0) target = $region61
    $region60: #{tpu_custom_call.1} parent=1 // pred_region
      %76 = dma.done [#allocation6], 2048
    $region61: #{tpu_custom_call.1} parent=1 // pred_fallthru
      _
    %v78 = vld [vmem:[%s0] sm:$0xff]
    %v79 = vld [vmem:[%s0 + $0x8] sm:$0xff]
    %v80 = vld [vmem:[%s0 + $0x10] sm:$0xff]
    %v81 = vld [vmem:[%s0 + $0x18] sm:$0xf]
    %v82 = vld [vmem:[#allocation2] sm:$0xff]
    %v83 = vld [vmem:[#allocation2 + $0x8] sm:$0xff]
    %v84 = vld [vmem:[#allocation2 + $0x10] sm:$0xff]
    %v85 = vld [vmem:[#allocation2 + $0x18] sm:$0xff]
    %v86 = vld [vmem:[#allocation2 + $0x20] sm:$0xff]
    %v87 = vld [vmem:[#allocation2 + $0x28] sm:$0xff]
    %v88 = vld [vmem:[#allocation2 + $0x30] sm:$0xff]
    %v89 = vld [vmem:[#allocation2 + $0x38] sm:$0xff]
    %v90 = vld [vmem:[#allocation2 + $0x40] sm:$0xff]
    %v91 = vld [vmem:[#allocation2 + $0x48] sm:$0xff]
    %v92 = vld [vmem:[#allocation2 + $0x50] sm:$0xff]
    %v93 = vld [vmem:[#allocation2 + $0x58] sm:$0xff]
    %v94 = vld [vmem:[#allocation2 + $0x60] sm:$0xff]
    %v95 = vld [vmem:[#allocation2 + $0x68] sm:$0xff]
    %v96 = vld [vmem:[#allocation2 + $0x70] sm:$0xff]
    %v97 = vld [vmem:[#allocation2 + $0x78] sm:$0xff]
    %v98 = vld [vmem:[#allocation2 + $0x80] sm:$0xff]
    %v99 = vld [vmem:[#allocation2 + $0x88] sm:$0xff]
    %v100 = vld [vmem:[#allocation2 + $0x90] sm:$0xff]
    %v101 = vld [vmem:[#allocation2 + $0x98] sm:$0xff]
    %v102 = vld [vmem:[#allocation2 + $0xa0] sm:$0xff]
    %v103 = vld [vmem:[#allocation2 + $0xa8] sm:$0xff]
    %v104 = vld [vmem:[#allocation2 + $0xb0] sm:$0xff]
    %v105 = vld [vmem:[#allocation2 + $0xb8] sm:$0xff]
    %v106 = vld [vmem:[#allocation2 + $0xc0] sm:$0xff]
    %v107 = vld [vmem:[#allocation2 + $0xc8] sm:$0xff]
    %v108 = vld [vmem:[#allocation2 + $0xd0] sm:$0xff]
    %v109 = vld [vmem:[#allocation2 + $0xd8] sm:$0xff]
    %v110 = vld [vmem:[#allocation2 + $0xe0] sm:$0xff]
    %v111 = vld [vmem:[#allocation2 + $0xe8] sm:$0xff]
    %v112 = vld [vmem:[#allocation2 + $0xf0] sm:$0xff]
    %v113 = vld [vmem:[#allocation2 + $0xf8] sm:$0xff]
    %v114 = vld [vmem:[#allocation2 + $0x100] sm:$0xff]
    %v115 = vld [vmem:[#allocation2 + $0x108] sm:$0xff]
    %v116 = vld [vmem:[#allocation2 + $0x110] sm:$0xff]
    %v117 = vld [vmem:[#allocation2 + $0x118] sm:$0xff]
    %v118 = vld [vmem:[#allocation2 + $0x120] sm:$0xff]
    %v119 = vld [vmem:[#allocation2 + $0x128] sm:$0xff]
    %v120 = vld [vmem:[#allocation2 + $0x130] sm:$0xff]
    %v121 = vld [vmem:[#allocation2 + $0x138] sm:$0xff]
    %v122 = vld [vmem:[#allocation2 + $0x140] sm:$0xff]
    %v123 = vld [vmem:[#allocation2 + $0x148] sm:$0xff]
    %v124 = vld [vmem:[#allocation2 + $0x150] sm:$0xff]
    %v125 = vld [vmem:[#allocation2 + $0x158] sm:$0xff]
    %v126 = vld [vmem:[#allocation2 + $0x160] sm:$0xff]
    %v127 = vld [vmem:[#allocation2 + $0x168] sm:$0xff]
    %v128 = vld [vmem:[#allocation2 + $0x170] sm:$0xff]
    %v129 = vld [vmem:[#allocation2 + $0x178] sm:$0xff]
    %v130 = vld [vmem:[#allocation2 + $0x180] sm:$0xff]
    %v131 = vld [vmem:[#allocation2 + $0x188] sm:$0xff]
    %v132 = vld [vmem:[#allocation2 + $0x190] sm:$0xff]
    %v133 = vld [vmem:[#allocation2 + $0x198] sm:$0xff]
    %v134 = vld [vmem:[#allocation2 + $0x1a0] sm:$0xff]
    %v135 = vld [vmem:[#allocation2 + $0x1a8] sm:$0xff]
    %v136 = vld [vmem:[#allocation2 + $0x1b0] sm:$0xff]
    %v137 = vld [vmem:[#allocation2 + $0x1b8] sm:$0xff]
    %v138 = vld [vmem:[#allocation2 + $0x1c0] sm:$0xff]
    %v139 = vld [vmem:[#allocation2 + $0x1c8] sm:$0xff]
    %v140 = vld [vmem:[#allocation2 + $0x1d0] sm:$0xff]
    %v141 = vld [vmem:[#allocation2 + $0x1d8] sm:$0xff]
    %v142 = vld [vmem:[#allocation2 + $0x1e0] sm:$0xff]
    %v143 = vld [vmem:[#allocation2 + $0x1e8] sm:$0xff]
    %v144 = vld [vmem:[#allocation2 + $0x1f0] sm:$0xff]
    %v145 = vld [vmem:[#allocation2 + $0x1f8] sm:$0xff]
    %v146 = vld [vmem:[#allocation2 + $0x200] sm:$0xff]
    %v147 = vld [vmem:[#allocation2 + $0x208] sm:$0xff]
    %v148 = vld [vmem:[#allocation2 + $0x210] sm:$0xff]
    %v149 = vld [vmem:[#allocation2 + $0x218] sm:$0xff]
    %v150 = vld [vmem:[#allocation2 + $0x220] sm:$0xff]
    %v151 = vld [vmem:[#allocation2 + $0x228] sm:$0xff]
    %v152 = vld [vmem:[#allocation2 + $0x230] sm:$0xff]
    %v153 = vld [vmem:[#allocation2 + $0x238] sm:$0xff]
    %v154 = vld [vmem:[#allocation2 + $0x240] sm:$0xff]
    %v155 = vld [vmem:[#allocation2 + $0x248] sm:$0xff]
    %v156 = vld [vmem:[#allocation2 + $0x250] sm:$0xff]
    %v157 = vld [vmem:[#allocation2 + $0x258] sm:$0xff]
    %v158 = vld [vmem:[#allocation2 + $0x260] sm:$0xff]
    %v159 = vld [vmem:[#allocation2 + $0x268] sm:$0xff]
    %v160 = vld [vmem:[#allocation2 + $0x270] sm:$0xff]
    %v161 = vld [vmem:[#allocation2 + $0x278] sm:$0xff]
    %v162 = vld [vmem:[#allocation2 + $0x280] sm:$0xff]
    %v163 = vld [vmem:[#allocation2 + $0x288] sm:$0xff]
    %v164 = vld [vmem:[#allocation2 + $0x290] sm:$0xff]
    %v165 = vld [vmem:[#allocation2 + $0x298] sm:$0xff]
    %v166 = vld [vmem:[#allocation2 + $0x2a0] sm:$0xff]
    %v167 = vld [vmem:[#allocation2 + $0x2a8] sm:$0xff]
    %v168 = vld [vmem:[#allocation2 + $0x2b0] sm:$0xff]
    %v169 = vld [vmem:[#allocation2 + $0x2b8] sm:$0xff]
    %v170 = vld [vmem:[#allocation2 + $0x2c0] sm:$0xff]
    %v171 = vld [vmem:[#allocation2 + $0x2c8] sm:$0xff]
    %v172 = vld [vmem:[#allocation2 + $0x2d0] sm:$0xff]
    %v173 = vld [vmem:[#allocation2 + $0x2d8] sm:$0xff]
    %v174 = vld [vmem:[#allocation2 + $0x2e0] sm:$0xff]
    %v175 = vld [vmem:[#allocation2 + $0x2e8] sm:$0xff]
    %v176 = vld [vmem:[#allocation2 + $0x2f0] sm:$0xff]
    %v177 = vld [vmem:[#allocation2 + $0x2f8] sm:$0xff]
    %v178 = vld [vmem:[#allocation2 + $0x300] sm:$0xff]
    %v179 = vld [vmem:[#allocation2 + $0x308] sm:$0xff]
    %v180 = vld [vmem:[%s2] sm:$0x3]
    %v182 = vperm.slane %v180, 0
    %v183 = vperm.slane %v180, 1
    %v190 = vunpack.c.l.b16 %v78
    %v191 = vunpack.c.h.b16 %v78
    %v192 = vunpack.c.l.b16 %v79
    %v193 = vunpack.c.h.b16 %v79
    %v194 = vunpack.c.l.b16 %v80
    %v195 = vunpack.c.h.b16 %v80
    %v196 = vunpack.c.l.b16 %v81
    %v197 = vpack.c.b16 %v190, %v190
    %v198 = vpack.c.b16 %v191, %v191
    %v199 = vpack.c.b16 %v192, %v192
    %v200 = vpack.c.b16 %v193, %v193
    %v201 = vpack.c.b16 %v194, %v194
    %v202 = vpack.c.b16 %v195, %v195
    %v203 = vpack.c.b16 %v196, %v196
    %v308 = vunpack.c.l.b16 %v82
    %v309 = vunpack.c.h.b16 %v82
    %v310 = vunpack.c.l.b16 %v83
    %v311 = vunpack.c.h.b16 %v83
    %v312 = vunpack.c.l.b16 %v84
    %v313 = vunpack.c.h.b16 %v84
    %v314 = vunpack.c.l.b16 %v85
    %v315 = vunpack.c.h.b16 %v85
    %v316 = vunpack.c.l.b16 %v86
    %v317 = vunpack.c.h.b16 %v86
    %v318 = vunpack.c.l.b16 %v87
    %v319 = vunpack.c.h.b16 %v87
    %v320 = vunpack.c.l.b16 %v88
    %v321 = vunpack.c.h.b16 %v88
    %v322 = vunpack.c.l.b16 %v89
    %v323 = vunpack.c.h.b16 %v89
    %v324 = vunpack.c.l.b16 %v90
    %v325 = vunpack.c.h.b16 %v90
    %v326 = vunpack.c.l.b16 %v91
    %v327 = vunpack.c.h.b16 %v91
    %v328 = vunpack.c.l.b16 %v92
    %v329 = vunpack.c.h.b16 %v92
    %v330 = vunpack.c.l.b16 %v93
    %v331 = vunpack.c.h.b16 %v93
    %v332 = vunpack.c.l.b16 %v94
    %v333 = vunpack.c.h.b16 %v94
    %v334 = vunpack.c.l.b16 %v95
    %v335 = vunpack.c.h.b16 %v95
    %v336 = vunpack.c.l.b16 %v96
    %v337 = vunpack.c.h.b16 %v96
    %v338 = vunpack.c.l.b16 %v97
    %v339 = vunpack.c.h.b16 %v97
    %v340 = vunpack.c.l.b16 %v98
    %v341 = vunpack.c.h.b16 %v98
    %v342 = vunpack.c.l.b16 %v99
    %v343 = vunpack.c.h.b16 %v99
    %v344 = vunpack.c.l.b16 %v100
    %v345 = vunpack.c.h.b16 %v100
    %v346 = vunpack.c.l.b16 %v101
    %v347 = vunpack.c.h.b16 %v101
    %v348 = vunpack.c.l.b16 %v102
    %v349 = vunpack.c.h.b16 %v102
    %v350 = vunpack.c.l.b16 %v103
    %v351 = vunpack.c.h.b16 %v103
    %v352 = vunpack.c.l.b16 %v104
    %v353 = vunpack.c.h.b16 %v104
    %v354 = vunpack.c.l.b16 %v105
    %v355 = vunpack.c.h.b16 %v105
    %v356 = vunpack.c.l.b16 %v106
    %v357 = vunpack.c.h.b16 %v106
    %v358 = vunpack.c.l.b16 %v107
    %v359 = vunpack.c.h.b16 %v107
    %v360 = vunpack.c.l.b16 %v108
    %v361 = vunpack.c.h.b16 %v108
    %v362 = vunpack.c.l.b16 %v109
    %v363 = vunpack.c.h.b16 %v109
    %v364 = vunpack.c.l.b16 %v110
    %v365 = vunpack.c.h.b16 %v110
    %v366 = vunpack.c.l.b16 %v111
    %v367 = vunpack.c.h.b16 %v111
    %v368 = vunpack.c.l.b16 %v112
    %v369 = vunpack.c.h.b16 %v112
    %v370 = vunpack.c.l.b16 %v113
    %v371 = vunpack.c.h.b16 %v113
    %v372 = vunpack.c.l.b16 %v114
    %v373 = vunpack.c.h.b16 %v114
    %v374 = vunpack.c.l.b16 %v115
    %v375 = vunpack.c.h.b16 %v115
    %v376 = vunpack.c.l.b16 %v116
    %v377 = vunpack.c.h.b16 %v116
    %v378 = vunpack.c.l.b16 %v117
    %v379 = vunpack.c.h.b16 %v117
    %v380 = vunpack.c.l.b16 %v118
    %v381 = vunpack.c.h.b16 %v118
    %v382 = vunpack.c.l.b16 %v119
    %v383 = vunpack.c.h.b16 %v119
    %v384 = vunpack.c.l.b16 %v120
    %v385 = vunpack.c.h.b16 %v120
    %v386 = vunpack.c.l.b16 %v121
    %v387 = vunpack.c.h.b16 %v121
    %v388 = vunpack.c.l.b16 %v122
    %v389 = vunpack.c.h.b16 %v122
    %v390 = vunpack.c.l.b16 %v123
    %v391 = vunpack.c.h.b16 %v123
    %v392 = vunpack.c.l.b16 %v124
    %v393 = vunpack.c.h.b16 %v124
    %v394 = vunpack.c.l.b16 %v125
    %v395 = vunpack.c.h.b16 %v125
    %v396 = vunpack.c.l.b16 %v126
    %v397 = vunpack.c.h.b16 %v126
    %v398 = vunpack.c.l.b16 %v127
    %v399 = vunpack.c.h.b16 %v127
    %v400 = vunpack.c.l.b16 %v128
    %v401 = vunpack.c.h.b16 %v128
    %v402 = vunpack.c.l.b16 %v129
    %v403 = vunpack.c.h.b16 %v129
    %v404 = vunpack.c.l.b16 %v130
    %v405 = vunpack.c.h.b16 %v130
    %v406 = vunpack.c.l.b16 %v131
    %v407 = vunpack.c.h.b16 %v131
    %v408 = vunpack.c.l.b16 %v132
    %v409 = vunpack.c.h.b16 %v132
    %v410 = vunpack.c.l.b16 %v133
    %v411 = vunpack.c.h.b16 %v133
    %v412 = vunpack.c.l.b16 %v134
    %v413 = vunpack.c.h.b16 %v134
    %v414 = vunpack.c.l.b16 %v135
    %v415 = vunpack.c.h.b16 %v135
    %v416 = vunpack.c.l.b16 %v136
    %v417 = vunpack.c.h.b16 %v136
    %v418 = vunpack.c.l.b16 %v137
    %v419 = vunpack.c.h.b16 %v137
    %v420 = vunpack.c.l.b16 %v138
    %v421 = vunpack.c.h.b16 %v138
    %v422 = vunpack.c.l.b16 %v139
    %v423 = vunpack.c.h.b16 %v139
    %v424 = vunpack.c.l.b16 %v140
    %v425 = vunpack.c.h.b16 %v140
    %v426 = vunpack.c.l.b16 %v141
    %v427 = vunpack.c.h.b16 %v141
    %v428 = vunpack.c.l.b16 %v142
    %v429 = vunpack.c.h.b16 %v142
    %v430 = vunpack.c.l.b16 %v143
    %v431 = vunpack.c.h.b16 %v143
    %v432 = vunpack.c.l.b16 %v144
    %v433 = vunpack.c.h.b16 %v144
    %v434 = vunpack.c.l.b16 %v145
    %v435 = vunpack.c.h.b16 %v145
    %v436 = vunpack.c.l.b16 %v146
    %v437 = vunpack.c.h.b16 %v146
    %v438 = vunpack.c.l.b16 %v147
    %v439 = vunpack.c.h.b16 %v147
    %v440 = vunpack.c.l.b16 %v148
    %v441 = vunpack.c.h.b16 %v148
    %v442 = vunpack.c.l.b16 %v149
    %v443 = vunpack.c.h.b16 %v149
    %v444 = vunpack.c.l.b16 %v150
    %v445 = vunpack.c.h.b16 %v150
    %v446 = vunpack.c.l.b16 %v151
    %v447 = vunpack.c.h.b16 %v151
    %v448 = vunpack.c.l.b16 %v152
    %v449 = vunpack.c.h.b16 %v152
    %v450 = vunpack.c.l.b16 %v153
    %v451 = vunpack.c.h.b16 %v153
    %v452 = vunpack.c.l.b16 %v154
    %v453 = vunpack.c.h.b16 %v154
    %v454 = vunpack.c.l.b16 %v155
    %v455 = vunpack.c.h.b16 %v155
    %v456 = vunpack.c.l.b16 %v156
    %v457 = vunpack.c.h.b16 %v156
    %v458 = vunpack.c.l.b16 %v157
    %v459 = vunpack.c.h.b16 %v157
    %v460 = vunpack.c.l.b16 %v158
    %v461 = vunpack.c.h.b16 %v158
    %v462 = vunpack.c.l.b16 %v159
    %v463 = vunpack.c.h.b16 %v159
    %v464 = vunpack.c.l.b16 %v160
    %v465 = vunpack.c.h.b16 %v160
    %v466 = vunpack.c.l.b16 %v161
    %v467 = vunpack.c.h.b16 %v161
    %v468 = vunpack.c.l.b16 %v162
    %v469 = vunpack.c.h.b16 %v162
    %v470 = vunpack.c.l.b16 %v163
    %v471 = vunpack.c.h.b16 %v163
    %v472 = vunpack.c.l.b16 %v164
    %v473 = vunpack.c.h.b16 %v164
    %v474 = vunpack.c.l.b16 %v165
    %v475 = vunpack.c.h.b16 %v165
    %v476 = vunpack.c.l.b16 %v166
    %v477 = vunpack.c.h.b16 %v166
    %v478 = vunpack.c.l.b16 %v167
    %v479 = vunpack.c.h.b16 %v167
    %v480 = vunpack.c.l.b16 %v168
    %v481 = vunpack.c.h.b16 %v168
    %v482 = vunpack.c.l.b16 %v169
    %v483 = vunpack.c.h.b16 %v169
    %v484 = vunpack.c.l.b16 %v170
    %v485 = vunpack.c.h.b16 %v170
    %v486 = vunpack.c.l.b16 %v171
    %v487 = vunpack.c.h.b16 %v171
    %v488 = vunpack.c.l.b16 %v172
    %v489 = vunpack.c.h.b16 %v172
    %v490 = vunpack.c.l.b16 %v173
    %v491 = vunpack.c.h.b16 %v173
    %v492 = vunpack.c.l.b16 %v174
    %v493 = vunpack.c.h.b16 %v174
    %v494 = vunpack.c.l.b16 %v175
    %v495 = vunpack.c.h.b16 %v175
    %v496 = vunpack.c.l.b16 %v176
    %v497 = vunpack.c.h.b16 %v176
    %v498 = vunpack.c.l.b16 %v177
    %v499 = vunpack.c.h.b16 %v177
    %v500 = vunpack.c.l.b16 %v178
    %v501 = vunpack.c.h.b16 %v178
    %v502 = vunpack.c.l.b16 %v179
    %v503 = vunpack.c.h.b16 %v179
    %v504 = vpack.c.b16 %v310, %v308
    %v505 = vpack.c.b16 %v311, %v309
    %v506 = vpack.c.b16 %v314, %v312
    %v507 = vpack.c.b16 %v315, %v313
    %v508 = vpack.c.b16 %v318, %v316
    %v509 = vpack.c.b16 %v319, %v317
    %v510 = vpack.c.b16 %v322, %v320
    %v511 = vpack.c.b16 %v323, %v321
    %v512 = vpack.c.b16 %v326, %v324
    %v513 = vpack.c.b16 %v327, %v325
    %v514 = vpack.c.b16 %v330, %v328
    %v515 = vpack.c.b16 %v331, %v329
    %v516 = vpack.c.b16 %v334, %v332
    %v517 = vpack.c.b16 %v335, %v333
    %v518 = vpack.c.b16 %v338, %v336
    %v519 = vpack.c.b16 %v339, %v337
    %v520 = vpack.c.b16 %v342, %v340
    %v521 = vpack.c.b16 %v343, %v341
    %v522 = vpack.c.b16 %v346, %v344
    %v523 = vpack.c.b16 %v347, %v345
    %v524 = vpack.c.b16 %v350, %v348
    %v525 = vpack.c.b16 %v351, %v349
    %v526 = vpack.c.b16 %v354, %v352
    %v527 = vpack.c.b16 %v355, %v353
    %v528 = vpack.c.b16 %v358, %v356
    %v529 = vpack.c.b16 %v359, %v357
    %v530 = vpack.c.b16 %v362, %v360
    %v531 = vpack.c.b16 %v363, %v361
    %v532 = vpack.c.b16 %v366, %v364
    %v533 = vpack.c.b16 %v367, %v365
    %v534 = vpack.c.b16 %v370, %v368
    %v535 = vpack.c.b16 %v371, %v369
    %v536 = vpack.c.b16 %v374, %v372
    %v537 = vpack.c.b16 %v375, %v373
    %v538 = vpack.c.b16 %v378, %v376
    %v539 = vpack.c.b16 %v379, %v377
    %v540 = vpack.c.b16 %v382, %v380
    %v541 = vpack.c.b16 %v383, %v381
    %v542 = vpack.c.b16 %v386, %v384
    %v543 = vpack.c.b16 %v387, %v385
    %v544 = vpack.c.b16 %v390, %v388
    %v545 = vpack.c.b16 %v391, %v389
    %v546 = vpack.c.b16 %v394, %v392
    %v547 = vpack.c.b16 %v395, %v393
    %v548 = vpack.c.b16 %v398, %v396
    %v549 = vpack.c.b16 %v399, %v397
    %v550 = vpack.c.b16 %v402, %v400
    %v551 = vpack.c.b16 %v403, %v401
    %v552 = vpack.c.b16 %v406, %v404
    %v553 = vpack.c.b16 %v407, %v405
    %v554 = vpack.c.b16 %v410, %v408
    %v555 = vpack.c.b16 %v411, %v409
    %v556 = vpack.c.b16 %v414, %v412
    %v557 = vpack.c.b16 %v415, %v413
    %v558 = vpack.c.b16 %v418, %v416
    %v559 = vpack.c.b16 %v419, %v417
    %v560 = vpack.c.b16 %v422, %v420
    %v561 = vpack.c.b16 %v423, %v421
    %v562 = vpack.c.b16 %v426, %v424
    %v563 = vpack.c.b16 %v427, %v425
    %v564 = vpack.c.b16 %v430, %v428
    %v565 = vpack.c.b16 %v431, %v429
    %v566 = vpack.c.b16 %v434, %v432
    %v567 = vpack.c.b16 %v435, %v433
    %v568 = vpack.c.b16 %v438, %v436
    %v569 = vpack.c.b16 %v439, %v437
    %v570 = vpack.c.b16 %v442, %v440
    %v571 = vpack.c.b16 %v443, %v441
    %v572 = vpack.c.b16 %v446, %v444
    %v573 = vpack.c.b16 %v447, %v445
    %v574 = vpack.c.b16 %v450, %v448
    %v575 = vpack.c.b16 %v451, %v449
    %v576 = vpack.c.b16 %v454, %v452
    %v577 = vpack.c.b16 %v455, %v453
    %v578 = vpack.c.b16 %v458, %v456
    %v579 = vpack.c.b16 %v459, %v457
    %v580 = vpack.c.b16 %v462, %v460
    %v581 = vpack.c.b16 %v463, %v461
    %v582 = vpack.c.b16 %v466, %v464
    %v583 = vpack.c.b16 %v467, %v465
    %v584 = vpack.c.b16 %v470, %v468
    %v585 = vpack.c.b16 %v471, %v469
    %v586 = vpack.c.b16 %v474, %v472
    %v587 = vpack.c.b16 %v475, %v473
    %v588 = vpack.c.b16 %v478, %v476
    %v589 = vpack.c.b16 %v479, %v477
    %v590 = vpack.c.b16 %v482, %v480
    %v591 = vpack.c.b16 %v483, %v481
    %v592 = vpack.c.b16 %v486, %v484
    %v593 = vpack.c.b16 %v487, %v485
    %v594 = vpack.c.b16 %v490, %v488
    %v595 = vpack.c.b16 %v491, %v489
    %v596 = vpack.c.b16 %v494, %v492
    %v597 = vpack.c.b16 %v495, %v493
    %v598 = vpack.c.b16 %v498, %v496
    %v599 = vpack.c.b16 %v499, %v497
    %v600 = vpack.c.b16 %v502, %v500
    %v601 = vpack.c.b16 %v503, %v501
    %vm700 = vcmask 130048
    %v702 = vsel %vm700, %v203, 0
    %704 = vmatpush.bf16.msra.mxu0 %v518
    %705 = vmatpush.bf16.msra.mxu0 %v516
    %706 = vmatpush.bf16.msra.mxu0 %v514
    %707 = vmatpush.bf16.msra.mxu0 %v512
    %708 = vmatpush.bf16.msra.mxu0 %v510
    %709 = vmatpush.bf16.msra.mxu0 %v508
    %710 = vmatpush.bf16.msra.mxu0 %v506
    %711 = vmatpush.bf16.msra.mxu0 %v504
    %712 = vmatmul.bf16.gmra.mxu0 %v197
    %v713 = vpop.f32.mrf.mxu0
    %v714 = vadd.f32 %v182, %v713
    %v715 = vpop.f32.mrf.mxu0
    %716 = vdwg.mxu0
    %717 = vmatpush.bf16.msra.mxu0 %v534
    %718 = vmatpush.bf16.msra.mxu0 %v532
    %719 = vmatpush.bf16.msra.mxu0 %v530
    %720 = vmatpush.bf16.msra.mxu0 %v528
    %721 = vmatpush.bf16.msra.mxu0 %v526
    %722 = vmatpush.bf16.msra.mxu0 %v524
    %723 = vmatpush.bf16.msra.mxu0 %v522
    %724 = vmatpush.bf16.msra.mxu0 %v520
    %725 = vmatmul.bf16.gmra.mxu0 %v198
    %v726 = vpop.f32.mrf.mxu0
    %v727 = vadd.f32 %v714, %v726
    %v728 = vpop.f32.mrf.mxu0
    %729 = vdwg.mxu0
    %730 = vmatpush.bf16.msra.mxu0 %v550
    %731 = vmatpush.bf16.msra.mxu0 %v548
    %732 = vmatpush.bf16.msra.mxu0 %v546
    %733 = vmatpush.bf16.msra.mxu0 %v544
    %734 = vmatpush.bf16.msra.mxu0 %v542
    %735 = vmatpush.bf16.msra.mxu0 %v540
    %736 = vmatpush.bf16.msra.mxu0 %v538
    %737 = vmatpush.bf16.msra.mxu0 %v536
    %738 = vmatmul.bf16.gmra.mxu0 %v199
    %v739 = vpop.f32.mrf.mxu0
    %v740 = vadd.f32 %v727, %v739
    %v741 = vpop.f32.mrf.mxu0
    %742 = vdwg.mxu0
    %743 = vmatpush.bf16.msra.mxu0 %v566
    %744 = vmatpush.bf16.msra.mxu0 %v564
    %745 = vmatpush.bf16.msra.mxu0 %v562
    %746 = vmatpush.bf16.msra.mxu0 %v560
    %747 = vmatpush.bf16.msra.mxu0 %v558
    %748 = vmatpush.bf16.msra.mxu0 %v556
    %749 = vmatpush.bf16.msra.mxu0 %v554
    %750 = vmatpush.bf16.msra.mxu0 %v552
    %751 = vmatmul.bf16.gmra.mxu0 %v200
    %v752 = vpop.f32.mrf.mxu0
    %v753 = vadd.f32 %v740, %v752
    %v754 = vpop.f32.mrf.mxu0
    %755 = vdwg.mxu0
    %756 = vmatpush.bf16.msra.mxu0 %v582
    %757 = vmatpush.bf16.msra.mxu0 %v580
    %758 = vmatpush.bf16.msra.mxu0 %v578
    %759 = vmatpush.bf16.msra.mxu0 %v576
    %760 = vmatpush.bf16.msra.mxu0 %v574
    %761 = vmatpush.bf16.msra.mxu0 %v572
    %762 = vmatpush.bf16.msra.mxu0 %v570
    %763 = vmatpush.bf16.msra.mxu0 %v568
    %764 = vmatmul.bf16.gmra.mxu0 %v201
    %v765 = vpop.f32.mrf.mxu0
    %v766 = vadd.f32 %v753, %v765
    %v767 = vpop.f32.mrf.mxu0
    %768 = vdwg.mxu0
    %769 = vmatpush.bf16.msra.mxu0 %v598
    %770 = vmatpush.bf16.msra.mxu0 %v596
    %771 = vmatpush.bf16.msra.mxu0 %v594
    %772 = vmatpush.bf16.msra.mxu0 %v592
    %773 = vmatpush.bf16.msra.mxu0 %v590
    %774 = vmatpush.bf16.msra.mxu0 %v588
    %775 = vmatpush.bf16.msra.mxu0 %v586
    %776 = vmatpush.bf16.msra.mxu0 %v584
    %777 = vmatmul.bf16.gmra.mxu0 %v202
    %v778 = vpop.f32.mrf.mxu0
    %v779 = vadd.f32 %v766, %v778
    %v780 = vpop.f32.mrf.mxu0
    %781 = vdwg.mxu0
    %782 = vmatpush.bf16.msra.mxu0 0
    %783 = vmatpush.bf16.msra.mxu0 0
    %784 = vmatpush.bf16.msra.mxu0 0
    %785 = vmatpush.bf16.msra.mxu0 0
    %786 = vmatpush.bf16.msra.mxu0 0
    %787 = vmatpush.bf16.msra.mxu0 0
    %788 = vmatpush.bf16.msra.mxu0 0
    %789 = vmatpush.bf16.msra.mxu0 %v600
    %790 = vmatmul.bf16.gmra.mxu0 %v702
    %v791 = vpop.f32.mrf.mxu0
    %v792 = vadd.f32 %v779, %v791
    %v793 = vpop.f32.mrf.mxu0
    %794 = vdwg.mxu0
    %795 = vmatpush.bf16.msra.mxu0 %v519
    %796 = vmatpush.bf16.msra.mxu0 %v517
    %797 = vmatpush.bf16.msra.mxu0 %v515
    %798 = vmatpush.bf16.msra.mxu0 %v513
    %799 = vmatpush.bf16.msra.mxu0 %v511
    %800 = vmatpush.bf16.msra.mxu0 %v509
    %801 = vmatpush.bf16.msra.mxu0 %v507
    %802 = vmatpush.bf16.msra.mxu0 %v505
    %803 = vmatmul.bf16.gmra.mxu0 %v197
    %v804 = vpop.f32.mrf.mxu0
    %v805 = vadd.f32 %v183, %v804
    %v806 = vpop.f32.mrf.mxu0
    %807 = vdwg.mxu0
    %808 = vmatpush.bf16.msra.mxu0 %v535
    %809 = vmatpush.bf16.msra.mxu0 %v533
    %810 = vmatpush.bf16.msra.mxu0 %v531
    %811 = vmatpush.bf16.msra.mxu0 %v529
    %812 = vmatpush.bf16.msra.mxu0 %v527
    %813 = vmatpush.bf16.msra.mxu0 %v525
    %814 = vmatpush.bf16.msra.mxu0 %v523
    %815 = vmatpush.bf16.msra.mxu0 %v521
    %816 = vmatmul.bf16.gmra.mxu0 %v198
    %v817 = vpop.f32.mrf.mxu0
    %v818 = vadd.f32 %v805, %v817
    %v819 = vpop.f32.mrf.mxu0
    %820 = vdwg.mxu0
    %821 = vmatpush.bf16.msra.mxu0 %v551
    %822 = vmatpush.bf16.msra.mxu0 %v549
    %823 = vmatpush.bf16.msra.mxu0 %v547
    %824 = vmatpush.bf16.msra.mxu0 %v545
    %825 = vmatpush.bf16.msra.mxu0 %v543
    %826 = vmatpush.bf16.msra.mxu0 %v541
    %827 = vmatpush.bf16.msra.mxu0 %v539
    %828 = vmatpush.bf16.msra.mxu0 %v537
    %829 = vmatmul.bf16.gmra.mxu0 %v199
    %v830 = vpop.f32.mrf.mxu0
    %v831 = vadd.f32 %v818, %v830
    %v832 = vpop.f32.mrf.mxu0
    %833 = vdwg.mxu0
    %834 = vmatpush.bf16.msra.mxu0 %v567
    %835 = vmatpush.bf16.msra.mxu0 %v565
    %836 = vmatpush.bf16.msra.mxu0 %v563
    %837 = vmatpush.bf16.msra.mxu0 %v561
    %838 = vmatpush.bf16.msra.mxu0 %v559
    %839 = vmatpush.bf16.msra.mxu0 %v557
    %840 = vmatpush.bf16.msra.mxu0 %v555
    %841 = vmatpush.bf16.msra.mxu0 %v553
    %842 = vmatmul.bf16.gmra.mxu0 %v200
    %v843 = vpop.f32.mrf.mxu0
    %v844 = vadd.f32 %v831, %v843
    %v845 = vpop.f32.mrf.mxu0
    %846 = vdwg.mxu0
    %847 = vmatpush.bf16.msra.mxu0 %v583
    %848 = vmatpush.bf16.msra.mxu0 %v581
    %849 = vmatpush.bf16.msra.mxu0 %v579
    %850 = vmatpush.bf16.msra.mxu0 %v577
    %851 = vmatpush.bf16.msra.mxu0 %v575
    %852 = vmatpush.bf16.msra.mxu0 %v573
    %853 = vmatpush.bf16.msra.mxu0 %v571
    %854 = vmatpush.bf16.msra.mxu0 %v569
    %855 = vmatmul.bf16.gmra.mxu0 %v201
    %v856 = vpop.f32.mrf.mxu0
    %v857 = vadd.f32 %v844, %v856
    %v858 = vpop.f32.mrf.mxu0
    %859 = vdwg.mxu0
    %860 = vmatpush.bf16.msra.mxu0 %v599
    %861 = vmatpush.bf16.msra.mxu0 %v597
    %862 = vmatpush.bf16.msra.mxu0 %v595
    %863 = vmatpush.bf16.msra.mxu0 %v593
    %864 = vmatpush.bf16.msra.mxu0 %v591
    %865 = vmatpush.bf16.msra.mxu0 %v589
    %866 = vmatpush.bf16.msra.mxu0 %v587
    %867 = vmatpush.bf16.msra.mxu0 %v585
    %868 = vmatmul.bf16.gmra.mxu0 %v202
    %v869 = vpop.f32.mrf.mxu0
    %v870 = vadd.f32 %v857, %v869
    %v871 = vpop.f32.mrf.mxu0
    %872 = vdwg.mxu0
    %873 = vmatpush.bf16.msra.mxu0 0
    %874 = vmatpush.bf16.msra.mxu0 0
    %875 = vmatpush.bf16.msra.mxu0 0
    %876 = vmatpush.bf16.msra.mxu0 0
    %877 = vmatpush.bf16.msra.mxu0 0
    %878 = vmatpush.bf16.msra.mxu0 0
    %879 = vmatpush.bf16.msra.mxu0 0
    %880 = vmatpush.bf16.msra.mxu0 %v601
    %881 = vmatmul.bf16.gmra.mxu0 %v702
    %v882 = vpop.f32.mrf.mxu0
    %v883 = vadd.f32 %v870, %v882
    %v884 = vpop.f32.mrf.mxu0
    %885 = vdwg.mxu0
    %v886 = vmax.f32 %v792, 0.0
    %v887 = vmax.f32 %v883, 0.0
    %v888 = vpack.c.bf16 %v886, %v886
    %v889 = vpack.c.bf16 %v887, %v887
    %v890 = vld [vmem:[#allocation5] sm:$0xf]
    %v891 = vld [vmem:[#allocation5 + $0x4] sm:$0xf]
    %v892 = vld [vmem:[#allocation5 + $0x8] sm:$0xf]
    %v893 = vld [vmem:[#allocation5 + $0xc] sm:$0xf]
    %v894 = vld [vmem:[#allocation5 + $0x10] sm:$0xf]
    %v895 = vld [vmem:[#allocation5 + $0x14] sm:$0xf]
    %v896 = vld [vmem:[#allocation5 + $0x18] sm:$0xf]
    %v897 = vld [vmem:[#allocation5 + $0x1c] sm:$0xf]
    %v898 = vld [vmem:[#allocation5 + $0x20] sm:$0xf]
    %v899 = vld [vmem:[#allocation5 + $0x24] sm:$0xf]
    %v900 = vld [vmem:[#allocation5 + $0x28] sm:$0xf]
    %v901 = vld [vmem:[#allocation5 + $0x2c] sm:$0xf]
    %v902 = vld [vmem:[#allocation5 + $0x30] sm:$0xf]
    %v903 = vld [vmem:[#allocation5 + $0x34] sm:$0xf]
    %v904 = vld [vmem:[#allocation5 + $0x38] sm:$0xf]
    %v905 = vld [vmem:[#allocation5 + $0x3c] sm:$0xf]
    %v906 = vld [vmem:[#allocation5 + $0x40] sm:$0xf]
    %v907 = vld [vmem:[#allocation5 + $0x44] sm:$0xf]
    %v908 = vld [vmem:[#allocation5 + $0x48] sm:$0xf]
    %v909 = vld [vmem:[#allocation5 + $0x4c] sm:$0xf]
    %v910 = vld [vmem:[#allocation5 + $0x50] sm:$0xf]
    %v911 = vld [vmem:[#allocation5 + $0x54] sm:$0xf]
    %v912 = vld [vmem:[#allocation5 + $0x58] sm:$0xf]
    %v913 = vld [vmem:[#allocation5 + $0x5c] sm:$0xf]
    %v914 = vld [vmem:[#allocation5 + $0x60] sm:$0xf]
    %v915 = vld [vmem:[#allocation5 + $0x64] sm:$0xf]
    %v916 = vld [vmem:[#allocation5 + $0x68] sm:$0xf]
    %v917 = vld [vmem:[#allocation5 + $0x6c] sm:$0xf]
    %v918 = vld [vmem:[#allocation5 + $0x70] sm:$0xf]
    %v919 = vld [vmem:[#allocation5 + $0x74] sm:$0xf]
    %v920 = vld [vmem:[#allocation5 + $0x78] sm:$0xf]
    %v921 = vld [vmem:[#allocation5 + $0x7c] sm:$0xf]
    %v922 = vld [vmem:[%s4] sm:$0x1]
    %v924 = vperm.slane %v922, 0
    %v958 = vunpack.c.l.b16 %v890
    %v959 = vunpack.c.l.b16 %v891
    %v960 = vunpack.c.l.b16 %v892
    %v961 = vunpack.c.l.b16 %v893
    %v962 = vunpack.c.l.b16 %v894
    %v963 = vunpack.c.l.b16 %v895
    %v964 = vunpack.c.l.b16 %v896
    %v965 = vunpack.c.l.b16 %v897
    %v966 = vunpack.c.l.b16 %v898
    %v967 = vunpack.c.l.b16 %v899
    %v968 = vunpack.c.l.b16 %v900
    %v969 = vunpack.c.l.b16 %v901
    %v970 = vunpack.c.l.b16 %v902
    %v971 = vunpack.c.l.b16 %v903
    %v972 = vunpack.c.l.b16 %v904
    %v973 = vunpack.c.l.b16 %v905
    %v974 = vunpack.c.l.b16 %v906
    %v975 = vunpack.c.l.b16 %v907
    %v976 = vunpack.c.l.b16 %v908
    %v977 = vunpack.c.l.b16 %v909
    %v978 = vunpack.c.l.b16 %v910
    %v979 = vunpack.c.l.b16 %v911
    %v980 = vunpack.c.l.b16 %v912
    %v981 = vunpack.c.l.b16 %v913
    %v982 = vunpack.c.l.b16 %v914
    %v983 = vunpack.c.l.b16 %v915
    %v984 = vunpack.c.l.b16 %v916
    %v985 = vunpack.c.l.b16 %v917
    %v986 = vunpack.c.l.b16 %v918
    %v987 = vunpack.c.l.b16 %v919
    %v988 = vunpack.c.l.b16 %v920
    %v989 = vunpack.c.l.b16 %v921
    %v990 = vpack.c.b16 %v959, %v958
    %v991 = vpack.c.b16 %v961, %v960
    %v992 = vpack.c.b16 %v963, %v962
    %v993 = vpack.c.b16 %v965, %v964
    %v994 = vpack.c.b16 %v967, %v966
    %v995 = vpack.c.b16 %v969, %v968
    %v996 = vpack.c.b16 %v971, %v970
    %v997 = vpack.c.b16 %v973, %v972
    %v998 = vpack.c.b16 %v975, %v974
    %v999 = vpack.c.b16 %v977, %v976
    %v1000 = vpack.c.b16 %v979, %v978
    %v1001 = vpack.c.b16 %v981, %v980
    %v1002 = vpack.c.b16 %v983, %v982
    %v1003 = vpack.c.b16 %v985, %v984
    %v1004 = vpack.c.b16 %v987, %v986
    %v1005 = vpack.c.b16 %v989, %v988
    %1022 = vmatpush.bf16.msra.mxu0 %v997
    %1023 = vmatpush.bf16.msra.mxu0 %v996
    %1024 = vmatpush.bf16.msra.mxu0 %v995
    %1025 = vmatpush.bf16.msra.mxu0 %v994
    %1026 = vmatpush.bf16.msra.mxu0 %v993
    %1027 = vmatpush.bf16.msra.mxu0 %v992
    %1028 = vmatpush.bf16.msra.mxu0 %v991
    %1029 = vmatpush.bf16.msra.mxu0 %v990
    %1030 = vmatmul.bf16.gmra.mxu0 %v888
    %v1031 = vpop.f32.mrf.mxu0
    %v1032 = vadd.f32 %v924, %v1031
    %v1033 = vpop.f32.mrf.mxu0
    %1034 = vdwg.mxu0
    %1035 = vmatpush.bf16.msra.mxu0 %v1005
    %1036 = vmatpush.bf16.msra.mxu0 %v1004
    %1037 = vmatpush.bf16.msra.mxu0 %v1003
    %1038 = vmatpush.bf16.msra.mxu0 %v1002
    %1039 = vmatpush.bf16.msra.mxu0 %v1001
    %1040 = vmatpush.bf16.msra.mxu0 %v1000
    %1041 = vmatpush.bf16.msra.mxu0 %v999
    %1042 = vmatpush.bf16.msra.mxu0 %v998
    %1043 = vmatmul.bf16.gmra.mxu0 %v889
    %v1044 = vpop.f32.mrf.mxu0
    %v1045 = vadd.f32 %v1032, %v1044
    %v1046 = vpop.f32.mrf.mxu0
    %1047 = vdwg.mxu0
    %v1048 = vmax.f32 %v1045, 0.0
    %v1049 = vpack.c.bf16 %v1048, %v1048
    %v1050 = vld [vmem:[%s5] sm:$0xf]
    %v1051 = vld [vmem:[%s5 + $0x4] sm:$0xf]
    %v1052 = vld [vmem:[%s5 + $0x8] sm:$0xf]
    %v1053 = vld [vmem:[%s5 + $0xc] sm:$0xf]
    %v1054 = vld [vmem:[%s5 + $0x10] sm:$0xf]
    %v1055 = vld [vmem:[%s5 + $0x14] sm:$0xf]
    %v1056 = vld [vmem:[%s5 + $0x18] sm:$0xf]
    %v1057 = vld [vmem:[%s5 + $0x1c] sm:$0xf]
    %v1058 = vld [vmem:[%s5 + $0x20] sm:$0xf]
    %v1059 = vld [vmem:[%s5 + $0x24] sm:$0xf]
    %v1060 = vld [vmem:[%s5 + $0x28] sm:$0xf]
    %v1061 = vld [vmem:[%s5 + $0x2c] sm:$0xf]
    %v1062 = vld [vmem:[%s5 + $0x30] sm:$0xf]
    %v1063 = vld [vmem:[%s5 + $0x34] sm:$0xf]
    %v1064 = vld [vmem:[%s5 + $0x38] sm:$0xf]
    %v1065 = vld [vmem:[%s5 + $0x3c] sm:$0xf]
    %v1066 = vld [vmem:[%s6] sm:$0x1]
    %v1068 = vperm.slane %v1066, 0
    %v1086 = vunpack.c.l.b16 %v1050
    %v1087 = vunpack.c.l.b16 %v1051
    %v1088 = vunpack.c.l.b16 %v1052
    %v1089 = vunpack.c.l.b16 %v1053
    %v1090 = vunpack.c.l.b16 %v1054
    %v1091 = vunpack.c.l.b16 %v1055
    %v1092 = vunpack.c.l.b16 %v1056
    %v1093 = vunpack.c.l.b16 %v1057
    %v1094 = vunpack.c.l.b16 %v1058
    %v1095 = vunpack.c.l.b16 %v1059
    %v1096 = vunpack.c.l.b16 %v1060
    %v1097 = vunpack.c.l.b16 %v1061
    %v1098 = vunpack.c.l.b16 %v1062
    %v1099 = vunpack.c.l.b16 %v1063
    %v1100 = vunpack.c.l.b16 %v1064
    %v1101 = vunpack.c.l.b16 %v1065
    %v1102 = vpack.c.b16 %v1087, %v1086
    %v1103 = vpack.c.b16 %v1089, %v1088
    %v1104 = vpack.c.b16 %v1091, %v1090
    %v1105 = vpack.c.b16 %v1093, %v1092
    %v1106 = vpack.c.b16 %v1095, %v1094
    %v1107 = vpack.c.b16 %v1097, %v1096
    %v1108 = vpack.c.b16 %v1099, %v1098
    %v1109 = vpack.c.b16 %v1101, %v1100
    %1118 = vmatpush.bf16.msra.mxu0 %v1109
    %1119 = vmatpush.bf16.msra.mxu0 %v1108
    %1120 = vmatpush.bf16.msra.mxu0 %v1107
    %1121 = vmatpush.bf16.msra.mxu0 %v1106
    %1122 = vmatpush.bf16.msra.mxu0 %v1105
    %1123 = vmatpush.bf16.msra.mxu0 %v1104
    %1124 = vmatpush.bf16.msra.mxu0 %v1103
    %1125 = vmatpush.bf16.msra.mxu0 %v1102
    %1126 = vmatmul.bf16.gmra.mxu0 %v1049
    %v1127 = vpop.f32.mrf.mxu0
    %v1128 = vadd.f32 %v1068, %v1127
    %v1129 = vpop.f32.mrf.mxu0
    %1130 = vdwg.mxu0
    %v1131 = vmax.f32 %v1128, 0.0
    %v1132 = vpack.c.bf16 %v1131, %v1131
    %v1133 = vld [vmem:[%s7] sm:$0xf]
    %v1134 = vld [vmem:[%s7 + $0x4] sm:$0xf]
    %v1135 = vld [vmem:[%s7 + $0x8] sm:$0xf]
    %v1136 = vld [vmem:[%s7 + $0xc] sm:$0xf]
    %v1137 = vld [vmem:[%s7 + $0x10] sm:$0xf]
    %v1138 = vld [vmem:[%s7 + $0x14] sm:$0xf]
    %v1139 = vld [vmem:[%s7 + $0x18] sm:$0xf]
    %v1140 = vld [vmem:[%s7 + $0x1c] sm:$0xf]
    %v1141 = vld [vmem:[%s8] sm:$0x1]
    %v1143 = vperm.slane %v1141, 0
    %v1153 = vunpack.c.l.b16 %v1133
    %v1154 = vunpack.c.l.b16 %v1134
    %v1155 = vunpack.c.l.b16 %v1135
    %v1156 = vunpack.c.l.b16 %v1136
    %v1157 = vunpack.c.l.b16 %v1137
    %v1158 = vunpack.c.l.b16 %v1138
    %v1159 = vunpack.c.l.b16 %v1139
    %v1160 = vunpack.c.l.b16 %v1140
    %v1161 = vpack.c.b16 %v1154, %v1153
    %v1162 = vpack.c.b16 %v1156, %v1155
    %v1163 = vpack.c.b16 %v1158, %v1157
    %v1164 = vpack.c.b16 %v1160, %v1159
    %vm1169 = vcmask 523264
    %v1171 = vsel %vm1169, %v1132, 0
    %1173 = vmatpush.bf16.msra.mxu0 0
    %1174 = vmatpush.bf16.msra.mxu0 0
    %1175 = vmatpush.bf16.msra.mxu0 0
    %1176 = vmatpush.bf16.msra.mxu0 0
    %1177 = vmatpush.bf16.msra.mxu0 %v1164
    %1178 = vmatpush.bf16.msra.mxu0 %v1163
    %1179 = vmatpush.bf16.msra.mxu0 %v1162
    %1180 = vmatpush.bf16.msra.mxu0 %v1161
    %1181 = vmatmul.bf16.gmra.mxu0 %v1171
    %v1182 = vpop.f32.mrf.mxu0
    %v1183 = vadd.f32 %v1143, %v1182
    %v1184 = vpop.f32.mrf.mxu0
    %1185 = vdwg.mxu0
    %v1186 = vmax.f32 %v1183, 0.0
    %v1187 = vpack.c.bf16 %v1186, %v1186
    %v1188 = vld [vmem:[%s9] sm:$0xf]
    %v1189 = vld [vmem:[%s9 + $0x4] sm:$0xf]
    %v1190 = vld [vmem:[%s9 + $0x8] sm:$0xf]
    %v1191 = vld [vmem:[%s9 + $0xc] sm:$0xf]
    %v1192 = vld [vmem:[%s10] sm:$0x1]
    %v1194 = vperm.slane %v1192, 0
    %v1200 = vunpack.c.l.b16 %v1188
    %v1201 = vunpack.c.l.b16 %v1189
    %v1202 = vunpack.c.l.b16 %v1190
    %v1203 = vunpack.c.l.b16 %v1191
    %v1204 = vpack.c.b16 %v1201, %v1200
    %v1205 = vpack.c.b16 %v1203, %v1202
    %vm1208 = vcmask 261120
    %v1210 = vsel %vm1208, %v1187, 0
    %1212 = vmatpush.bf16.msra.mxu0 0
    %1213 = vmatpush.bf16.msra.mxu0 0
    %1214 = vmatpush.bf16.msra.mxu0 0
    %1215 = vmatpush.bf16.msra.mxu0 0
    %1216 = vmatpush.bf16.msra.mxu0 0
    %1217 = vmatpush.bf16.msra.mxu0 0
    %1218 = vmatpush.bf16.msra.mxu0 %v1205
    %1219 = vmatpush.bf16.msra.mxu0 %v1204
    %1220 = vmatmul.bf16.gmra.mxu0 %v1210
    %v1221 = vpop.f32.mrf.mxu0
    %v1222 = vadd.f32 %v1194, %v1221
    %v1223 = vpop.f32.mrf.mxu0
    %1224 = vdwg.mxu0
    %v1225 = vmax.f32 %v1222, 0.0
    %v1226 = vpack.c.bf16 %v1225, %v1225
    %v1227 = vld [vmem:[%s11] sm:$0xf]
    %v1228 = vld [vmem:[%s11 + $0x4] sm:$0xf]
    %v1229 = vld [vmem:[%s12] sm:$0x1]
    %v1231 = vperm.slane %v1229, 0
    %v1235 = vunpack.c.l.b16 %v1227
    %v1236 = vunpack.c.l.b16 %v1228
    %v1237 = vpack.c.b16 %v1236, %v1235
    %v1240 = vsel %vm700, %v1226, 0
    %1242 = vmatpush.bf16.msra.mxu0 0
    %1243 = vmatpush.bf16.msra.mxu0 0
    %1244 = vmatpush.bf16.msra.mxu0 0
    %1245 = vmatpush.bf16.msra.mxu0 0
    %1246 = vmatpush.bf16.msra.mxu0 0
    %1247 = vmatpush.bf16.msra.mxu0 0
    %1248 = vmatpush.bf16.msra.mxu0 0
    %1249 = vmatpush.bf16.msra.mxu0 %v1237
    %1250 = vmatmul.bf16.gmra.mxu0 %v1240
    %v1251 = vpop.f32.mrf.mxu0
    %v1252 = vadd.f32 %v1231, %v1251
    %v1253 = vpop.f32.mrf.mxu0
    %1254 = vdwg.mxu0
    %1255 = vst [vmem:[#allocation7] sm:$0xff] %v1252
    // Predicated region
    $region62: #{tpu_custom_call.1} parent=1 // pred_check
      _
    $region63: #{tpu_custom_call.1} parent=1 // pred_check_branch
      %1257 = sbr.rel (0) target = $region65
    $region64: #{tpu_custom_call.1} parent=1 // pred_region
      %1259 = vsyncadd [#allocation4], 0
      %s1261 = sshll.u32 [#allocation7], 4
      %s1262 = int_to_ptr.vmem [resolvable:$true] %s1261
      %s1263 = sshll.u32 %s13, 4
      %s1264 = int_to_ptr.hbm [resolvable:$true] %s1263
      %1266 = dma.vmem_to_hbm [thread:$0]  %s1262, 128, %s1264, [#allocation4]
    $region65: #{tpu_custom_call.1} parent=1 // pred_fallthru
      _
    // Predicated region
    $region66: #{tpu_custom_call.1} parent=1 // pred_check
      _
    $region67: #{tpu_custom_call.1} parent=1 // pred_check_branch
      %1268 = sbr.rel (0) target = $region69
    $region68: #{tpu_custom_call.1} parent=1 // pred_region
      %1270 = dma.done [#allocation4], 128
    $region69: #{tpu_custom_call.1} parent=1 // pred_fallthru
      _
    %1271 = vsyncpa [#allocation3], 1
    %1272 = vsyncpa [#allocation6], 1
    %1273 = vsyncpa [#allocation4], 1

</llo_original>
